<compile_context>
chip_gen: v6e
topology: v6e:2x2x1
jax: 0.10.0
libtpu: 0.0.40
codegen_flags: <defaults>
</compile_context>

<pallas_src>
import functools

import jax
import jax.numpy as jnp
from jax.experimental import pallas as pl
from jax.experimental.pallas import tpu as pltpu

C_PAD = 128  # lane-dense padded class dimension


def _round_up(x, m):
    return ((x + m - 1) // m) * m


def custom_net_kernel(x_ref,
                      w1_ref, b1_ref,
                      w2_ref, b2_ref,
                      w3_ref, b3_ref,
                      w4_ref, b4_ref,
                      out_ref):
    x = x_ref[...]                                                   # (TB, 2) f32

    # fc1 + ReLU : K=2, so do it on the VPU (two broadcast FMAs), no MXU pass.
    h = (x[:, 0:1] * w1_ref[0:1, :]
         + x[:, 1:2] * w1_ref[1:2, :]
         + b1_ref[...])
    h = jnp.maximum(h, 0.0)                                          # (TB, 32) f32

    # fc2 + ReLU (bf16 MXU, f32 accumulate)
    h = jnp.dot(h.astype(jnp.bfloat16), w2_ref[...],
                preferred_element_type=jnp.float32)
    h = jnp.maximum(h + b2_ref[...], 0.0)                            # (TB, 64) f32

    # fc3 + ReLU
    h = jnp.dot(h.astype(jnp.bfloat16), w3_ref[...],
                preferred_element_type=jnp.float32)
    h = jnp.maximum(h + b3_ref[...], 0.0)                            # (TB, 128) f32

    # fc4 into a lane-dense (TB, 128) slab; padded columns carry bias = -1e30
    logits = jnp.dot(h.astype(jnp.bfloat16), w4_ref[...],
                     preferred_element_type=jnp.float32)
    logits = logits + b4_ref[...]                                    # (TB, 128) f32

    # numerically-stable softmax; padded columns -> exp(-huge) == 0
    m = jnp.max(logits, axis=-1, keepdims=True)
    e = jnp.exp(logits - m)
    s = jnp.sum(e, axis=-1, keepdims=True)
    out_ref[...] = e * pl.reciprocal(s, approx=True)


@functools.partial(jax.jit, static_argnames=("num_classes", "tile_b"))
def custom_net_forward(x, params, num_classes, tile_b=512):
    """x: (B, 2) float32; params: dict of w1..w4 ((in, out)) and b1..b4 ((out,))."""
    B = x.shape[0]
    C = num_classes

    # Batch tile: multiple of 8 (f32 sublanes), capped at tile_b.
    tb = min(tile_b, _round_up(B, 8))
    b_pad = _round_up(B, tb)
    if b_pad != B:
        x = jnp.pad(x, ((0, b_pad - B), (0, 0)))

    # Parameter prep: bf16 MXU weights, (1, N) f32 biases, lane-padded layer 4.
    w1 = params["w1"].astype(jnp.float32)                           # (2, 32), VPU layer
    b1 = params["b1"].reshape(1, -1).astype(jnp.float32)
    w2 = params["w2"].astype(jnp.bfloat16)
    b2 = params["b2"].reshape(1, -1).astype(jnp.float32)
    w3 = params["w3"].astype(jnp.bfloat16)
    b3 = params["b3"].reshape(1, -1).astype(jnp.float32)
    w4 = jnp.zeros((128, C_PAD), jnp.bfloat16).at[:, :C].set(
        params["w4"].astype(jnp.bfloat16))
    b4 = jnp.full((1, C_PAD), -1e30, jnp.float32).at[0, :C].set(
        params["b4"].astype(jnp.float32))

    def resident(arr):
        # Whole-array block, constant index map -> stays in VMEM across steps.
        return pl.BlockSpec(arr.shape, lambda i: (0, 0))

    grid = (b_pad // tb,)

    out_padded = pl.pallas_call(
        custom_net_kernel,
        out_shape=jax.ShapeDtypeStruct((b_pad, C_PAD), jnp.float32),
        grid=grid,
        in_specs=[
            pl.BlockSpec((tb, 2), lambda i: (i, 0)),                # streamed x tile
            resident(w1), resident(b1),
            resident(w2), resident(b2),
            resident(w3), resident(b3),
            resident(w4), resident(b4),
        ],
        out_specs=pl.BlockSpec((tb, C_PAD), lambda i: (i, 0)),      # lane-dense store
        compiler_params=pltpu.CompilerParams(
            dimension_semantics=("parallel",)),
    )(x, w1, b1, w2, b2, w3, b3, w4, b4)

    return out_padded[:B, :C]


def init_params(key, num_classes):
    """Deterministic init mimicking nn.Linear's U(-1/sqrt(fan_in), 1/sqrt(fan_in))."""
    dims = [(2, 32), (32, 64), (64, 128), (128, num_classes)]
    params = {}
    for i, (fan_in, fan_out) in enumerate(dims, start=1):
        key, kw, kb = jax.random.split(key, 3)
        bound = 1.0 / jnp.sqrt(jnp.float32(fan_in))
        params[f"w{i}"] = jax.random.uniform(
            kw, (fan_in, fan_out), jnp.float32, -bound, bound)
        params[f"b{i}"] = jax.random.uniform(
            kb, (fan_out,), jnp.float32, -bound, bound)
    return params


def reference_forward(x, params):
    """Pure-JAX f32 reference of the PyTorch forward."""
    h = jnp.maximum(x @ params["w1"] + params["b1"], 0.0)
    h = jnp.maximum(h @ params["w2"] + params["b2"], 0.0)
    h = jnp.maximum(h @ params["w3"] + params["b3"], 0.0)
    logits = h @ params["w4"] + params["b4"]
    return jax.nn.softmax(logits, axis=-1)


if __name__ == "__main__":
    key = jax.random.PRNGKey(0)
    key_x, key_x2, key_p = jax.random.split(key, 3)

    num_classes = 3
    params = init_params(key_p, num_classes)

    # Small primary check (single grid step).
    batch = 8
    x = jax.random.normal(key_x, (batch, 2), jnp.float32)
    out = jax.block_until_ready(custom_net_forward(x, params, num_classes))
    assert out.shape == (batch, num_classes)
    assert jnp.allclose(jnp.sum(out, axis=-1), 1.0, atol=1e-2)
    assert jnp.allclose(out, reference_forward(x, params), atol=3e-2)

    # Exercise multi-step grid + batch padding path (grid=4, padded 240 -> 256).
    batch2 = 240
    x2 = jax.random.normal(key_x2, (batch2, 2), jnp.float32)
    out2 = jax.block_until_ready(
        custom_net_forward(x2, params, num_classes, tile_b=64))
    assert out2.shape == (batch2, num_classes)
    assert jnp.allclose(jnp.sum(out2, axis=-1), 1.0, atol=1e-2)
    assert jnp.allclose(out2, reference_forward(x2, params), atol=3e-2)

    print("KERNEL_OK")
</pallas_src>

<mosaic_0001>
module attributes {stable_mosaic.version = 11 : i64} {
  func.func @custom_net_kernel(%arg0: i32, %arg1: memref<8x2xf32, #tpu.memory_space<vmem>>, %arg2: memref<2x32xf32, #tpu.memory_space<vmem>>, %arg3: memref<1x32xf32, #tpu.memory_space<vmem>>, %arg4: memref<32x64xbf16, #tpu.memory_space<vmem>>, %arg5: memref<1x64xf32, #tpu.memory_space<vmem>>, %arg6: memref<64x128xbf16, #tpu.memory_space<vmem>>, %arg7: memref<1x128xf32, #tpu.memory_space<vmem>>, %arg8: memref<128x128xbf16, #tpu.memory_space<vmem>>, %arg9: memref<1x128xf32, #tpu.memory_space<vmem>>, %arg10: memref<8x128xf32, #tpu.memory_space<vmem>>) attributes {dimension_semantics = [#tpu.dimension_semantics<parallel>], iteration_bounds = array<i64: 1>, scalar_prefetch = 0 : i64, scratch_operands = 0 : i64, tpu.core_type = #tpu.core_type<tc>, window_params = [{transform_indices = @transform_0, window_bounds = array<i64: 8, 2>}, {pipeline_mode = #tpu.pipeline_mode<synchronous>, transform_indices = @transform_1, window_bounds = array<i64: 2, 32>}, {pipeline_mode = #tpu.pipeline_mode<synchronous>, transform_indices = @transform_2, window_bounds = array<i64: 1, 32>}, {pipeline_mode = #tpu.pipeline_mode<synchronous>, transform_indices = @transform_3, window_bounds = array<i64: 32, 64>}, {pipeline_mode = #tpu.pipeline_mode<synchronous>, transform_indices = @transform_4, window_bounds = array<i64: 1, 64>}, {pipeline_mode = #tpu.pipeline_mode<synchronous>, transform_indices = @transform_5, window_bounds = array<i64: 64, 128>}, {pipeline_mode = #tpu.pipeline_mode<synchronous>, transform_indices = @transform_6, window_bounds = array<i64: 1, 128>}, {pipeline_mode = #tpu.pipeline_mode<synchronous>, transform_indices = @transform_7, window_bounds = array<i64: 128, 128>}, {pipeline_mode = #tpu.pipeline_mode<synchronous>, transform_indices = @transform_8, window_bounds = array<i64: 1, 128>}, {transform_indices = @transform_9, window_bounds = array<i64: 8, 128>}]} {
    %c0 = arith.constant 0 : index
    %c0_0 = arith.constant 0 : index
    %0 = vector.load %arg1[%c0, %c0_0] : memref<8x2xf32, #tpu.memory_space<vmem>>, vector<8x2xf32>
    %1 = vector.extract_strided_slice %0 {offsets = [0, 0], sizes = [8, 1], strides = [1, 1]} : vector<8x2xf32> to vector<8x1xf32>
    %c0_1 = arith.constant 0 : index
    %c0_2 = arith.constant 0 : index
    %2 = vector.load %arg2[%c0_1, %c0_2] : memref<2x32xf32, #tpu.memory_space<vmem>>, vector<1x32xf32>
    %3 = vector.broadcast %1 : vector<8x1xf32> to vector<8x32xf32>
    %4 = vector.broadcast %2 : vector<1x32xf32> to vector<8x32xf32>
    %5 = arith.mulf %3, %4 : vector<8x32xf32>
    %6 = vector.extract_strided_slice %0 {offsets = [0, 1], sizes = [8, 1], strides = [1, 1]} : vector<8x2xf32> to vector<8x1xf32>
    %c1 = arith.constant 1 : index
    %c0_3 = arith.constant 0 : index
    %7 = vector.load %arg2[%c1, %c0_3] : memref<2x32xf32, #tpu.memory_space<vmem>>, vector<1x32xf32>
    %8 = vector.broadcast %6 : vector<8x1xf32> to vector<8x32xf32>
    %9 = vector.broadcast %7 : vector<1x32xf32> to vector<8x32xf32>
    %10 = arith.mulf %8, %9 : vector<8x32xf32>
    %11 = arith.addf %5, %10 : vector<8x32xf32>
    %c0_4 = arith.constant 0 : index
    %c0_5 = arith.constant 0 : index
    %12 = vector.load %arg3[%c0_4, %c0_5] : memref<1x32xf32, #tpu.memory_space<vmem>>, vector<1x32xf32>
    %13 = vector.broadcast %12 : vector<1x32xf32> to vector<8x32xf32>
    %14 = arith.addf %11, %13 : vector<8x32xf32>
    %cst = arith.constant 0.000000e+00 : f32
    %15 = vector.broadcast %cst : f32 to vector<8x32xf32>
    %16 = arith.maximumf %14, %15 : vector<8x32xf32>
    %17 = arith.truncf %16 : vector<8x32xf32> to vector<8x32xbf16>
    %c0_6 = arith.constant 0 : index
    %c0_7 = arith.constant 0 : index
    %18 = vector.load %arg4[%c0_6, %c0_7] : memref<32x64xbf16, #tpu.memory_space<vmem>>, vector<32x64xbf16>
    %cst_8 = arith.constant dense<0.000000e+00> : vector<8x64xf32>
    %19 = tpu.matmul %17, %18, %cst_8 {dimension_numbers = #tpu.dot_dimension_numbers<[1], [0], [0], [1], [0, 0, 1, 1], [], []>} : vector<8x32xbf16>, vector<32x64xbf16>, vector<8x64xf32> -> vector<8x64xf32>
    %c0_9 = arith.constant 0 : index
    %c0_10 = arith.constant 0 : index
    %20 = vector.load %arg5[%c0_9, %c0_10] : memref<1x64xf32, #tpu.memory_space<vmem>>, vector<1x64xf32>
    %21 = vector.broadcast %20 : vector<1x64xf32> to vector<8x64xf32>
    %22 = arith.addf %19, %21 : vector<8x64xf32>
    %cst_11 = arith.constant 0.000000e+00 : f32
    %23 = vector.broadcast %cst_11 : f32 to vector<8x64xf32>
    %24 = arith.maximumf %22, %23 : vector<8x64xf32>
    %25 = arith.truncf %24 : vector<8x64xf32> to vector<8x64xbf16>
    %c0_12 = arith.constant 0 : index
    %c0_13 = arith.constant 0 : index
    %26 = vector.load %arg6[%c0_12, %c0_13] : memref<64x128xbf16, #tpu.memory_space<vmem>>, vector<64x128xbf16>
    %cst_14 = arith.constant dense<0.000000e+00> : vector<8x128xf32>
    %27 = tpu.matmul %25, %26, %cst_14 {dimension_numbers = #tpu.dot_dimension_numbers<[1], [0], [0], [1], [0, 0, 1, 1], [], []>} : vector<8x64xbf16>, vector<64x128xbf16>, vector<8x128xf32> -> vector<8x128xf32>
    %c0_15 = arith.constant 0 : index
    %c0_16 = arith.constant 0 : index
    %28 = vector.load %arg7[%c0_15, %c0_16] : memref<1x128xf32, #tpu.memory_space<vmem>>, vector<1x128xf32>
    %29 = vector.broadcast %28 : vector<1x128xf32> to vector<8x128xf32>
    %30 = arith.addf %27, %29 : vector<8x128xf32>
    %cst_17 = arith.constant 0.000000e+00 : f32
    %31 = vector.broadcast %cst_17 : f32 to vector<8x128xf32>
    %32 = arith.maximumf %30, %31 : vector<8x128xf32>
    %33 = arith.truncf %32 : vector<8x128xf32> to vector<8x128xbf16>
    %c0_18 = arith.constant 0 : index
    %c0_19 = arith.constant 0 : index
    %34 = vector.load %arg8[%c0_18, %c0_19] : memref<128x128xbf16, #tpu.memory_space<vmem>>, vector<128x128xbf16>
    %cst_20 = arith.constant dense<0.000000e+00> : vector<8x128xf32>
    %35 = tpu.matmul %33, %34, %cst_20 {dimension_numbers = #tpu.dot_dimension_numbers<[1], [0], [0], [1], [0, 0, 1, 1], [], []>} : vector<8x128xbf16>, vector<128x128xbf16>, vector<8x128xf32> -> vector<8x128xf32>
    %c0_21 = arith.constant 0 : index
    %c0_22 = arith.constant 0 : index
    %36 = vector.load %arg9[%c0_21, %c0_22] : memref<1x128xf32, #tpu.memory_space<vmem>>, vector<1x128xf32>
    %37 = vector.broadcast %36 : vector<1x128xf32> to vector<8x128xf32>
    %38 = arith.addf %35, %37 : vector<8x128xf32>
    %cst_23 = arith.constant dense<0xFF800000> : vector<8xf32>
    %39 = vector.multi_reduction <maximumf>, %38, %cst_23 [1] : vector<8x128xf32> to vector<8xf32>
    %40 = vector.shape_cast %39 : vector<8xf32> to vector<8x1xf32>
    %41 = vector.broadcast %40 : vector<8x1xf32> to vector<8x128xf32>
    %42 = arith.subf %38, %41 : vector<8x128xf32>
    %43 = math.exp %42 : vector<8x128xf32>
    %cst_24 = arith.constant dense<0.000000e+00> : vector<8xf32>
    %44 = vector.multi_reduction <add>, %43, %cst_24 [1] : vector<8x128xf32> to vector<8xf32>
    %45 = vector.shape_cast %44 : vector<8xf32> to vector<8x1xf32>
    %46 = tpu.reciprocal %45 {approx = true} : vector<8x1xf32> -> vector<8x1xf32>
    %47 = vector.broadcast %46 : vector<8x1xf32> to vector<8x128xf32>
    %48 = arith.mulf %43, %47 : vector<8x128xf32>
    %c0_25 = arith.constant 0 : index
    %c0_26 = arith.constant 0 : index
    %49 = vector.load %arg10[%c0_25, %c0_26] : memref<8x128xf32, #tpu.memory_space<vmem>>, vector<8x128xf32>
    tpu.vector_store %arg10[%c0_25, %c0_26], %48 {strides = array<i32>} : memref<8x128xf32, #tpu.memory_space<vmem>>, vector<8x128xf32>,
    return
  }
  func.func @transform_0(%arg0: i32) -> (i32, i32) {
    %c0_i32 = arith.constant 0 : i32
    %c0_i32_0 = arith.constant 0 : i32
    return %arg0, %c0_i32 : i32, i32
  }
  func.func @transform_1(%arg0: i32) -> (i32, i32) {
    %c0_i32 = arith.constant 0 : i32
    %c0_i32_0 = arith.constant 0 : i32
    %c0_i32_1 = arith.constant 0 : i32
    return %c0_i32, %c0_i32_0 : i32, i32
  }
  func.func @transform_2(%arg0: i32) -> (i32, i32) {
    %c0_i32 = arith.constant 0 : i32
    %c0_i32_0 = arith.constant 0 : i32
    %c0_i32_1 = arith.constant 0 : i32
    return %c0_i32, %c0_i32_0 : i32, i32
  }
  func.func @transform_3(%arg0: i32) -> (i32, i32) {
    %c0_i32 = arith.constant 0 : i32
    %c0_i32_0 = arith.constant 0 : i32
    %c0_i32_1 = arith.constant 0 : i32
    return %c0_i32, %c0_i32_0 : i32, i32
  }
  func.func @transform_4(%arg0: i32) -> (i32, i32) {
    %c0_i32 = arith.constant 0 : i32
    %c0_i32_0 = arith.constant 0 : i32
    %c0_i32_1 = arith.constant 0 : i32
    return %c0_i32, %c0_i32_0 : i32, i32
  }
  func.func @transform_5(%arg0: i32) -> (i32, i32) {
    %c0_i32 = arith.constant 0 : i32
    %c0_i32_0 = arith.constant 0 : i32
    %c0_i32_1 = arith.constant 0 : i32
    return %c0_i32, %c0_i32_0 : i32, i32
  }
  func.func @transform_6(%arg0: i32) -> (i32, i32) {
    %c0_i32 = arith.constant 0 : i32
    %c0_i32_0 = arith.constant 0 : i32
    %c0_i32_1 = arith.constant 0 : i32
    return %c0_i32, %c0_i32_0 : i32, i32
  }
  func.func @transform_7(%arg0: i32) -> (i32, i32) {
    %c0_i32 = arith.constant 0 : i32
    %c0_i32_0 = arith.constant 0 : i32
    %c0_i32_1 = arith.constant 0 : i32
    return %c0_i32, %c0_i32_0 : i32, i32
  }
  func.func @transform_8(%arg0: i32) -> (i32, i32) {
    %c0_i32 = arith.constant 0 : i32
    %c0_i32_0 = arith.constant 0 : i32
    %c0_i32_1 = arith.constant 0 : i32
    return %c0_i32, %c0_i32_0 : i32, i32
  }
  func.func @transform_9(%arg0: i32) -> (i32, i32) {
    %c0_i32 = arith.constant 0 : i32
    %c0_i32_0 = arith.constant 0 : i32
    return %arg0, %c0_i32 : i32, i32
  }
}

</mosaic_0001>

<llo_original>
// kernel: custom_net_forward.1
$region0: #{custom_net_forward.1}
  #allocation0 [shape = 'u32[]', space=smem, size = 0x4, offset = 0x4, fixed_abs, tag = 'smem constant byte address 0x4 - core index']
  #allocation1 [shape = 'u32[144,128]{1,0:T(1,128)}', space=vmem, size = 0x12000, scoped, tag = 'internal scratch']
  %s0 = inlined_call_operand.vmem [shape: f32[8,2], index: 0, kind: input, shape index: {}]
  %s1 = inlined_call_operand.vmem [shape: f32[2,32], index: 1, kind: input, shape index: {}]
  %s2 = inlined_call_operand.vmem [shape: f32[1,32], index: 2, kind: input, shape index: {}]
  %s3 = inlined_call_operand.vmem [shape: bf16[32,64], index: 3, kind: input, shape index: {}]
  %s4 = inlined_call_operand.vmem [shape: f32[1,64], index: 4, kind: input, shape index: {}]
  %s5 = inlined_call_operand.vmem [shape: bf16[64,128], index: 5, kind: input, shape index: {}]
  %s6 = inlined_call_operand.vmem [shape: f32[1,128], index: 6, kind: input, shape index: {}]
  %s7 = inlined_call_operand.vmem [shape: bf16[128,128], index: 7, kind: input, shape index: {}]
  %s8 = inlined_call_operand.vmem [shape: f32[1,128], index: 8, kind: input, shape index: {}]
  %s9 = inlined_call_operand.vmem [shape: f32[8,128], index: 9, kind: output, shape index: {}]
  %s10 = sld [smem:[#allocation0]]
  $region46: #{custom_net_forward.1} parent=0
    _
  %s12 = ssub.s32 1, %s10
  %s13 = scalar_select 0, %s12, %s10
  // Predicated region
  $region2: #{custom_net_forward.1} parent=0 // pred_check
    _
  $region3: #{custom_net_forward.1} parent=0 // pred_check_branch
    %15 = sbr.rel (0) target = $region5
  $region4: #{custom_net_forward.1} parent=0 // pred_region
    _
  $region5: #{custom_net_forward.1} parent=0 // pred_fallthru
    _
  // Predicated region
  $region6: #{custom_net_forward.1} parent=0 // pred_check
    _
  $region7: #{custom_net_forward.1} parent=0 // pred_check_branch
    %17 = sbr.rel (0) target = $region9
  $region8: #{custom_net_forward.1} parent=0 // pred_region
    _
  $region9: #{custom_net_forward.1} parent=0 // pred_fallthru
    _
  // Predicated region
  $region10: #{custom_net_forward.1} parent=0 // pred_check
    _
  $region11: #{custom_net_forward.1} parent=0 // pred_check_branch
    %19 = sbr.rel (0) target = $region13
  $region12: #{custom_net_forward.1} parent=0 // pred_region
    _
  $region13: #{custom_net_forward.1} parent=0 // pred_fallthru
    _
  // Predicated region
  $region14: #{custom_net_forward.1} parent=0 // pred_check
    _
  $region15: #{custom_net_forward.1} parent=0 // pred_check_branch
    %21 = sbr.rel (0) target = $region17
  $region16: #{custom_net_forward.1} parent=0 // pred_region
    _
  $region17: #{custom_net_forward.1} parent=0 // pred_fallthru
    _
  // Predicated region
  $region18: #{custom_net_forward.1} parent=0 // pred_check
    _
  $region19: #{custom_net_forward.1} parent=0 // pred_check_branch
    %23 = sbr.rel (0) target = $region21
  $region20: #{custom_net_forward.1} parent=0 // pred_region
    _
  $region21: #{custom_net_forward.1} parent=0 // pred_fallthru
    _
  // Predicated region
  $region22: #{custom_net_forward.1} parent=0 // pred_check
    _
  $region23: #{custom_net_forward.1} parent=0 // pred_check_branch
    %25 = sbr.rel (0) target = $region25
  $region24: #{custom_net_forward.1} parent=0 // pred_region
    _
  $region25: #{custom_net_forward.1} parent=0 // pred_fallthru
    _
  // Predicated region
  $region26: #{custom_net_forward.1} parent=0 // pred_check
    _
  $region27: #{custom_net_forward.1} parent=0 // pred_check_branch
    %27 = sbr.rel (0) target = $region29
  $region28: #{custom_net_forward.1} parent=0 // pred_region
    _
  $region29: #{custom_net_forward.1} parent=0 // pred_fallthru
    _
  // Predicated region
  $region30: #{custom_net_forward.1} parent=0 // pred_check
    _
  $region31: #{custom_net_forward.1} parent=0 // pred_check_branch
    %29 = sbr.rel (0) target = $region33
  $region32: #{custom_net_forward.1} parent=0 // pred_region
    _
  $region33: #{custom_net_forward.1} parent=0 // pred_fallthru
    _
  // Predicated region
  $region34: #{custom_net_forward.1} parent=0 // pred_check
    _
  $region35: #{custom_net_forward.1} parent=0 // pred_check_branch
    %31 = sbr.rel (0) target = $region37
  $region36: #{custom_net_forward.1} parent=0 // pred_region
    _
  $region37: #{custom_net_forward.1} parent=0 // pred_fallthru
    _
  %v33 = vld [vmem:[%s0] sm:$0xff]
  %v34 = vld [vmem:[%s1] sm:$0x1]
  %36 = vset.pattern.permute.xlu0 0
  %37 = vperm.xlu0 %36, %v33
  %v38 = vpop.permute.xlu0 %37
  %v40 = vlaneseq
  %v41 = vshrl.u32 %v40, 7
  %v42 = vsub.s32 0, %v41
  %v43 = vrot.slane %v34, %v42
  %v44 = vmul.f32 %v38, %v43
  %v45 = vld [vmem:[%s1 + $0x1] sm:$0x1]
  %46 = vset.pattern.permute.xlu0 1
  %47 = vperm.xlu0 %46, %v33
  %v48 = vpop.permute.xlu0 %47
  %v50 = vlaneseq
  %v51 = vshrl.u32 %v50, 7
  %v52 = vsub.s32 0, %v51
  %v53 = vrot.slane %v45, %v52
  %v54 = vmul.f32 %v48, %v53
  %v55 = vadd.f32 %v44, %v54
  %v56 = vld [vmem:[%s2] sm:$0x1]
  %v58 = vlaneseq
  %v59 = vshrl.u32 %v58, 7
  %v60 = vsub.s32 0, %v59
  %v61 = vrot.slane %v56, %v60
  %v63 = vadd.f32 %v55, %v61
  %v64 = vmax.f32 %v63, 0.0
  %v65 = vpack.c.bf16 %v64, %v64
  %v66 = vld [vmem:[%s3] sm:$0xf]
  %v67 = vld [vmem:[%s3 + $0x4] sm:$0xf]
  %v68 = vld [vmem:[%s3 + $0x8] sm:$0xf]
  %v69 = vld [vmem:[%s3 + $0xc] sm:$0xf]
  %v70 = vld [vmem:[%s4] sm:$0x1]
  %v72 = vlaneseq
  %v73 = vshrl.u32 %v72, 7
  %v74 = vsub.s32 0, %v73
  %v75 = vrot.slane %v70, %v74
  %v81 = vunpack.c.l.b16 %v66
  %v82 = vunpack.c.l.b16 %v67
  %v83 = vunpack.c.l.b16 %v68
  %v84 = vunpack.c.l.b16 %v69
  %v85 = vpack.c.b16 %v82, %v81
  %v86 = vpack.c.b16 %v84, %v83
  %vm89 = vcmask 261120
  %v91 = vsel %vm89, %v65, 0
  %93 = vmatprep.subr.bf16.mxu0 0
  %94 = vmatpush1.bf16.msra.mxu0 0
  %95 = vmatprep.subr.bf16.mxu0 0
  %96 = vmatpush1.bf16.msra.mxu0 0
  %97 = vmatprep.subr.bf16.mxu0 0
  %98 = vmatpush1.bf16.msra.mxu0 0
  %99 = vmatprep.subr.bf16.mxu0 0
  %100 = vmatpush1.bf16.msra.mxu0 0
  %101 = vmatprep.subr.bf16.mxu0 0
  %102 = vmatpush1.bf16.msra.mxu0 0
  %103 = vmatprep.subr.bf16.mxu0 0
  %104 = vmatpush1.bf16.msra.mxu0 0
  %105 = vmatprep.subr.bf16.mxu0 0
  %106 = vmatpush1.bf16.msra.mxu0 %v86
  %107 = vmatprep.subr.bf16.mxu0 0
  %108 = vmatpush1.bf16.msra.mxu0 %v85
  %109 = vmatprep.subr.bf16.mxu0 0
  %110 = vmatpush2.bf16.msra.mxu0 0
  %111 = vmatprep.subr.bf16.mxu0 0
  %112 = vmatpush2.bf16.msra.mxu0 0
  %113 = vmatprep.subr.bf16.mxu0 0
  %114 = vmatpush2.bf16.msra.mxu0 0
  %115 = vmatprep.subr.bf16.mxu0 0
  %116 = vmatpush2.bf16.msra.mxu0 0
  %117 = vmatprep.subr.bf16.mxu0 0
  %118 = vmatpush2.bf16.msra.mxu0 0
  %119 = vmatprep.subr.bf16.mxu0 0
  %120 = vmatpush2.bf16.msra.mxu0 0
  %121 = vmatprep.subr.bf16.mxu0 0
  %122 = vmatpush2.bf16.msra.mxu0 0
  %123 = vmatprep.subr.bf16.mxu0 0
  %124 = vmatpush2.bf16.msra.mxu0 0
  %125 = vmatprep.mubr.bf16.mxu0 0
  %126 = vmatmul.mubr.bf16.gmra.mxu0 %v91
  %v127 = vpop.f32.mrf.mxu0
  %v128 = vadd.f32 %v75, %v127
  %v129 = vpop.f32.mrf.mxu0
  %v130 = vpop.f32.mrf.mxu0
  %v131 = vpop.f32.mrf.mxu0
  %132 = vdwg.mxu0
  %v133 = vmax.f32 %v128, 0.0
  %v134 = vpack.c.bf16 %v133, %v133
  %v135 = vld [vmem:[%s5] sm:$0xf]
  %v136 = vld [vmem:[%s5 + $0x4] sm:$0xf]
  %v137 = vld [vmem:[%s5 + $0x8] sm:$0xf]
  %v138 = vld [vmem:[%s5 + $0xc] sm:$0xf]
  %v139 = vld [vmem:[%s5 + $0x10] sm:$0xf]
  %v140 = vld [vmem:[%s5 + $0x14] sm:$0xf]
  %v141 = vld [vmem:[%s5 + $0x18] sm:$0xf]
  %v142 = vld [vmem:[%s5 + $0x1c] sm:$0xf]
  %v143 = vld [vmem:[%s6] sm:$0x1]
  %v145 = vlaneseq
  %v146 = vshrl.u32 %v145, 7
  %v147 = vsub.s32 0, %v146
  %v148 = vrot.slane %v143, %v147
  %v158 = vunpack.c.l.b16 %v135
  %v159 = vunpack.c.l.b16 %v136
  %v160 = vunpack.c.l.b16 %v137
  %v161 = vunpack.c.l.b16 %v138
  %v162 = vunpack.c.l.b16 %v139
  %v163 = vunpack.c.l.b16 %v140
  %v164 = vunpack.c.l.b16 %v141
  %v165 = vunpack.c.l.b16 %v142
  %v166 = vpack.c.b16 %v159, %v158
  %v167 = vpack.c.b16 %v161, %v160
  %v168 = vpack.c.b16 %v163, %v162
  %v169 = vpack.c.b16 %v165, %v164
  %vm174 = vcmask 523264
  %v176 = vsel %vm174, %v134, 0
  %178 = vmatprep.subr.bf16.mxu0 0
  %179 = vmatpush1.bf16.msra.mxu0 0
  %180 = vmatprep.subr.bf16.mxu0 0
  %181 = vmatpush1.bf16.msra.mxu0 0
  %182 = vmatprep.subr.bf16.mxu0 0
  %183 = vmatpush1.bf16.msra.mxu0 0
  %184 = vmatprep.subr.bf16.mxu0 0
  %185 = vmatpush1.bf16.msra.mxu0 0
  %186 = vmatprep.subr.bf16.mxu0 0
  %187 = vmatpush1.bf16.msra.mxu0 %v169
  %188 = vmatprep.subr.bf16.mxu0 0
  %189 = vmatpush1.bf16.msra.mxu0 %v168
  %190 = vmatprep.subr.bf16.mxu0 0
  %191 = vmatpush1.bf16.msra.mxu0 %v167
  %192 = vmatprep.subr.bf16.mxu0 0
  %193 = vmatpush1.bf16.msra.mxu0 %v166
  %194 = vmatprep.subr.bf16.mxu0 0
  %195 = vmatpush2.bf16.msra.mxu0 0
  %196 = vmatprep.subr.bf16.mxu0 0
  %197 = vmatpush2.bf16.msra.mxu0 0
  %198 = vmatprep.subr.bf16.mxu0 0
  %199 = vmatpush2.bf16.msra.mxu0 0
  %200 = vmatprep.subr.bf16.mxu0 0
  %201 = vmatpush2.bf16.msra.mxu0 0
  %202 = vmatprep.subr.bf16.mxu0 0
  %203 = vmatpush2.bf16.msra.mxu0 0
  %204 = vmatprep.subr.bf16.mxu0 0
  %205 = vmatpush2.bf16.msra.mxu0 0
  %206 = vmatprep.subr.bf16.mxu0 0
  %207 = vmatpush2.bf16.msra.mxu0 0
  %208 = vmatprep.subr.bf16.mxu0 0
  %209 = vmatpush2.bf16.msra.mxu0 0
  %210 = vmatprep.mubr.bf16.mxu0 0
  %211 = vmatmul.mubr.bf16.gmra.mxu0 %v176
  %v212 = vpop.f32.mrf.mxu0
  %v213 = vadd.f32 %v148, %v212
  %v214 = vpop.f32.mrf.mxu0
  %v215 = vpop.f32.mrf.mxu0
  %v216 = vpop.f32.mrf.mxu0
  %217 = vdwg.mxu0
  %v218 = vmax.f32 %v213, 0.0
  %v219 = vpack.c.bf16 %v218, %v218
  %v220 = vld [vmem:[%s7] sm:$0xf]
  %v221 = vld [vmem:[%s7 + $0x4] sm:$0xf]
  %v222 = vld [vmem:[%s7 + $0x8] sm:$0xf]
  %v223 = vld [vmem:[%s7 + $0xc] sm:$0xf]
  %v224 = vld [vmem:[%s7 + $0x10] sm:$0xf]
  %v225 = vld [vmem:[%s7 + $0x14] sm:$0xf]
  %v226 = vld [vmem:[%s7 + $0x18] sm:$0xf]
  %v227 = vld [vmem:[%s7 + $0x1c] sm:$0xf]
  %v228 = vld [vmem:[%s7 + $0x20] sm:$0xf]
  %v229 = vld [vmem:[%s7 + $0x24] sm:$0xf]
  %v230 = vld [vmem:[%s7 + $0x28] sm:$0xf]
  %v231 = vld [vmem:[%s7 + $0x2c] sm:$0xf]
  %v232 = vld [vmem:[%s7 + $0x30] sm:$0xf]
  %v233 = vld [vmem:[%s7 + $0x34] sm:$0xf]
  %v234 = vld [vmem:[%s7 + $0x38] sm:$0xf]
  %v235 = vld [vmem:[%s7 + $0x3c] sm:$0xf]
  %v236 = vld [vmem:[%s8] sm:$0x1]
  %v238 = vlaneseq
  %v239 = vshrl.u32 %v238, 7
  %v240 = vsub.s32 0, %v239
  %v241 = vrot.slane %v236, %v240
  %v259 = vunpack.c.l.b16 %v220
  %v260 = vunpack.c.l.b16 %v221
  %v261 = vunpack.c.l.b16 %v222
  %v262 = vunpack.c.l.b16 %v223
  %v263 = vunpack.c.l.b16 %v224
  %v264 = vunpack.c.l.b16 %v225
  %v265 = vunpack.c.l.b16 %v226
  %v266 = vunpack.c.l.b16 %v227
  %v267 = vunpack.c.l.b16 %v228
  %v268 = vunpack.c.l.b16 %v229
  %v269 = vunpack.c.l.b16 %v230
  %v270 = vunpack.c.l.b16 %v231
  %v271 = vunpack.c.l.b16 %v232
  %v272 = vunpack.c.l.b16 %v233
  %v273 = vunpack.c.l.b16 %v234
  %v274 = vunpack.c.l.b16 %v235
  %v275 = vpack.c.b16 %v260, %v259
  %v276 = vpack.c.b16 %v262, %v261
  %v277 = vpack.c.b16 %v264, %v263
  %v278 = vpack.c.b16 %v266, %v265
  %v279 = vpack.c.b16 %v268, %v267
  %v280 = vpack.c.b16 %v270, %v269
  %v281 = vpack.c.b16 %v272, %v271
  %v282 = vpack.c.b16 %v274, %v273
  %291 = vmatprep.subr.bf16.mxu0 0
  %292 = vmatpush1.bf16.msra.mxu0 %v282
  %293 = vmatprep.subr.bf16.mxu0 0
  %294 = vmatpush1.bf16.msra.mxu0 %v281
  %295 = vmatprep.subr.bf16.mxu0 0
  %296 = vmatpush1.bf16.msra.mxu0 %v280
  %297 = vmatprep.subr.bf16.mxu0 0
  %298 = vmatpush1.bf16.msra.mxu0 %v279
  %299 = vmatprep.subr.bf16.mxu0 0
  %300 = vmatpush1.bf16.msra.mxu0 %v278
  %301 = vmatprep.subr.bf16.mxu0 0
  %302 = vmatpush1.bf16.msra.mxu0 %v277
  %303 = vmatprep.subr.bf16.mxu0 0
  %304 = vmatpush1.bf16.msra.mxu0 %v276
  %305 = vmatprep.subr.bf16.mxu0 0
  %306 = vmatpush1.bf16.msra.mxu0 %v275
  %307 = vmatprep.subr.bf16.mxu0 0
  %308 = vmatpush2.bf16.msra.mxu0 0
  %309 = vmatprep.subr.bf16.mxu0 0
  %310 = vmatpush2.bf16.msra.mxu0 0
  %311 = vmatprep.subr.bf16.mxu0 0
  %312 = vmatpush2.bf16.msra.mxu0 0
  %313 = vmatprep.subr.bf16.mxu0 0
  %314 = vmatpush2.bf16.msra.mxu0 0
  %315 = vmatprep.subr.bf16.mxu0 0
  %316 = vmatpush2.bf16.msra.mxu0 0
  %317 = vmatprep.subr.bf16.mxu0 0
  %318 = vmatpush2.bf16.msra.mxu0 0
  %319 = vmatprep.subr.bf16.mxu0 0
  %320 = vmatpush2.bf16.msra.mxu0 0
  %321 = vmatprep.subr.bf16.mxu0 0
  %322 = vmatpush2.bf16.msra.mxu0 0
  %323 = vmatprep.mubr.bf16.mxu0 0
  %324 = vmatmul.mubr.bf16.gmra.mxu0 %v219
  %v325 = vpop.f32.mrf.mxu0
  %v326 = vadd.f32 %v241, %v325
  %v327 = vpop.f32.mrf.mxu0
  %v328 = vpop.f32.mrf.mxu0
  %v329 = vpop.f32.mrf.mxu0
  %330 = vdwg.mxu0
  %331 = vmax.xlane.f32.xlu0 %v326
  %v332 = vpop.xlane.xlu0 %331
  %v333 = vsub.f32 %v326, %v332
  %v334 = vmul.f32 %v333, 1.442695
  %v335 = vpow.pop %v334
  %336 = vadd.xlane.f32.xlu0 %v335
  %v337 = vpop.xlane.xlu0 %336
  %v338 = vrcp.pop %v337
  %v339 = vmul.f32 %v335, %v338
  %340 = vst [vmem:[%s9] sm:$0xff] %v339
  // Predicated region
  $region38: #{custom_net_forward.1} parent=0 // pred_check
    _
  $region39: #{custom_net_forward.1} parent=0 // pred_check_branch
    %342 = sbr.rel (0) target = $region41
  $region40: #{custom_net_forward.1} parent=0 // pred_region
    _
  $region41: #{custom_net_forward.1} parent=0 // pred_fallthru
    _
  // Predicated region
  $region42: #{custom_net_forward.1} parent=0 // pred_check
    _
  $region43: #{custom_net_forward.1} parent=0 // pred_check_branch
    %344 = sbr.rel (0) target = $region45
  $region44: #{custom_net_forward.1} parent=0 // pred_region
    _
  $region45: #{custom_net_forward.1} parent=0 // pred_fallthru
    _

</llo_original>
